<compile_context>
chip_gen: v7x
topology: tpu7x:2x2x1
jax: 0.10.0
libtpu: 0.0.40
codegen_flags: <defaults>
</compile_context>

<pallas_src>
import jax
import jax.numpy as jnp
from jax import lax
from jax.experimental import pallas as pl
from jax.experimental.pallas import tpu as pltpu  # noqa: F401  (TPU backend)


def linear_add_relu_kernel(x_ref, w_ref, b_ref, other_ref, o_ref):
    # x_ref    : (B, 256)   activations
    # w_ref    : (10, 256)  weight in native torch layout (lane-dense in VMEM)
    # b_ref    : (1, 10)    bias
    # other_ref: (1, 10)    residual `other`
    # out[b, n] = relu( sum_k x[b, k] * w[n, k] + b[0, n] + other[0, n] )
    acc = lax.dot_general(
        x_ref[...], w_ref[...],
        dimension_numbers=(((1,), (1,)), ((), ())),   # contract x dim 1 with w dim 1
        preferred_element_type=jnp.float32,
    )                                                  # (B, 10), f32 accumulation
    v2 = acc + b_ref[...] + other_ref[...]             # broadcast (1, 10) over B
    o_ref[...] = jnp.maximum(v2, 0.0).astype(o_ref.dtype)


def _linear_add_relu(x1, weight, bias2d, other):
    """x1: (B, 256), weight: (N, 256), bias2d: (1, N), other: (1, N)."""
    B, K = x1.shape
    N = weight.shape[0]
    f32 = 4
    cost = pl.CostEstimate(
        flops=2 * B * K * N,
        bytes_accessed=(x1.size + weight.size + bias2d.size + other.size + B * N) * f32,
        transcendentals=0,
    )
    # Gridless: single invocation, all operands resident in VMEM.
    return pl.pallas_call(
        linear_add_relu_kernel,
        out_shape=jax.ShapeDtypeStruct((B, N), jnp.float32),
        in_specs=[
            pl.BlockSpec(x1.shape, lambda: (0, 0)),
            pl.BlockSpec(weight.shape, lambda: (0, 0)),
            pl.BlockSpec(bias2d.shape, lambda: (0, 0)),
            pl.BlockSpec(other.shape, lambda: (0, 0)),
        ],
        out_specs=pl.BlockSpec((B, N), lambda: (0, 0)),
        cost_estimate=cost,
    )(x1, weight, bias2d, other)


# One jitted executable per shape: wrapper + pallas_call = one host dispatch.
linear_add_relu = jax.jit(_linear_add_relu)


if __name__ == "__main__":
    key = jax.random.PRNGKey(0)
    k1, k2, k3, k4 = jax.random.split(key, 4)

    # Shapes from nn.Linear(256, 10) applied to a (1, 256) input.
    in_features, out_features = 256, 10
    bound = 1.0 / jnp.sqrt(in_features)
    weight = jax.random.uniform(k1, (out_features, in_features),
                                minval=-bound, maxval=bound, dtype=jnp.float32)
    bias = jax.random.uniform(k2, (out_features,),
                              minval=-bound, maxval=bound, dtype=jnp.float32)
    # Parameter-init-time reshape (done once, NOT per call).
    bias2d = bias.reshape(1, out_features)

    # Module-level tensors from the PyTorch script.
    other = jax.random.normal(k3, (1, out_features), dtype=jnp.float32)
    x1 = jax.random.normal(k4, (1, in_features), dtype=jnp.float32)

    out = linear_add_relu(x1, weight, bias2d, other)
    jax.block_until_ready(out)

    # Reference check with plain JAX.
    ref = jnp.maximum(x1 @ weight.T + bias + other, 0.0)
    assert out.shape == (1, out_features)
    assert jnp.allclose(out, ref, atol=1e-5, rtol=1e-5)

    print("KERNEL_OK")
</pallas_src>

<mosaic_0001>
module attributes {stable_mosaic.version = 11 : i64} {
  func.func @linear_add_relu_kernel(%arg0: memref<1x256xf32, #tpu.memory_space<vmem>>, %arg1: memref<10x256xf32, #tpu.memory_space<vmem>>, %arg2: memref<1x10xf32, #tpu.memory_space<vmem>>, %arg3: memref<1x10xf32, #tpu.memory_space<vmem>>, %arg4: memref<1x10xf32, #tpu.memory_space<vmem>>) attributes {dimension_semantics = [], scalar_prefetch = 0 : i64, scratch_operands = 0 : i64, tpu.core_type = #tpu.core_type<tc>} {
    %c0 = arith.constant 0 : index
    %c0_0 = arith.constant 0 : index
    %0 = vector.load %arg0[%c0, %c0_0] : memref<1x256xf32, #tpu.memory_space<vmem>>, vector<1x256xf32>
    %c0_1 = arith.constant 0 : index
    %c0_2 = arith.constant 0 : index
    %1 = vector.load %arg1[%c0_1, %c0_2] : memref<10x256xf32, #tpu.memory_space<vmem>>, vector<10x256xf32>
    %cst = arith.constant dense<0.000000e+00> : vector<1x10xf32>
    %2 = tpu.matmul %0, %1, %cst {dimension_numbers = #tpu.dot_dimension_numbers<[1], [1], [0], [0], [0, 0, 1, 0], [], []>} : vector<1x256xf32>, vector<10x256xf32>, vector<1x10xf32> -> vector<1x10xf32>
    %c0_3 = arith.constant 0 : index
    %c0_4 = arith.constant 0 : index
    %3 = vector.load %arg2[%c0_3, %c0_4] : memref<1x10xf32, #tpu.memory_space<vmem>>, vector<1x10xf32>
    %4 = arith.addf %2, %3 : vector<1x10xf32>
    %c0_5 = arith.constant 0 : index
    %c0_6 = arith.constant 0 : index
    %5 = vector.load %arg3[%c0_5, %c0_6] : memref<1x10xf32, #tpu.memory_space<vmem>>, vector<1x10xf32>
    %6 = arith.addf %4, %5 : vector<1x10xf32>
    %cst_7 = arith.constant 0.000000e+00 : f32
    %7 = vector.broadcast %cst_7 : f32 to vector<1x10xf32>
    %8 = arith.maximumf %6, %7 : vector<1x10xf32>
    %c0_8 = arith.constant 0 : index
    %c0_9 = arith.constant 0 : index
    %9 = vector.load %arg4[%c0_8, %c0_9] : memref<1x10xf32, #tpu.memory_space<vmem>>, vector<1x10xf32>
    tpu.vector_store %arg4[%c0_8, %c0_9], %8 {strides = array<i32>} : memref<1x10xf32, #tpu.memory_space<vmem>>, vector<1x10xf32>,
    return
  }
}

</mosaic_0001>

<llo_original>
// kernel: _linear_add_relu.1
$region0: #{_linear_add_relu.1}
  #allocation0 [shape = 'u32[]', space=smem, size = 0x4, offset = 0x4, fixed_abs, tag = 'smem constant byte address 0x4 - core index']
  #allocation1 [shape = 'u32[144,128]{1,0:T(1,128)}', space=vmem, size = 0x12000, scoped, tag = 'internal scratch']
  %s0 = inlined_call_operand.hbm [shape: f32[1,256], index: 0, kind: input, shape index: {}]
  %s1 = inlined_call_operand.hbm [shape: f32[10,256], index: 1, kind: input, shape index: {}]
  %s2 = inlined_call_operand.vmem [shape: f32[1,10], index: 2, kind: input, shape index: {}]
  %s3 = inlined_call_operand.vmem [shape: f32[1,10], index: 3, kind: input, shape index: {}]
  %s4 = inlined_call_operand.hbm [shape: f32[1,10], index: 4, kind: output, shape index: {}]
  %s5 = sld [smem:[#allocation0]]
  $region34: #{_linear_add_relu.1} parent=0
    _
  %s7 = ssub.s32 1, %s5
  %s8 = scalar_select 0, %s7, %s5
  $region1: #{_linear_add_relu.1} parent=0
    #allocation2 [shape = 'u8[1024]{0}', space=vmem, size = 0x400, scoped, tag = 'input window, operand 0, single buffered']
    #allocation3 [shape = 's32[1]{0}', space=sflag, size = 0x4, scoped, tag = 'scoped memory for _linear_add_relu.1']
    #allocation4 [shape = 's32[1]{0}', space=sflag, size = 0x4, scoped, tag = 'scoped memory for _linear_add_relu.1']
    #allocation5 [shape = 'u8[16384]{0}', space=vmem, size = 0x4000, scoped, tag = 'input window, operand 1, single buffered']
    #allocation6 [shape = 's32[1]{0}', space=sflag, size = 0x4, scoped, tag = 'scoped memory for _linear_add_relu.1']
    #allocation7 [shape = 'u8[512]{0}', space=vmem, size = 0x400, scoped, tag = 'output window, operand 0, single buffered']
    %9 = vsyncpa [#allocation3], 0
    %10 = vsyncpa [#allocation6], 0
    %11 = vsyncpa [#allocation4], 0
    // Predicated region
    $region2: #{_linear_add_relu.1} parent=1 // pred_check
      _
    $region3: #{_linear_add_relu.1} parent=1 // pred_check_branch
      %13 = sbr.rel (0) target = $region5
    $region4: #{_linear_add_relu.1} parent=1 // pred_region
      %s15 = ssub.s32 32, 32
      %16 = vsyncadd [#allocation3], %s15
      %s18 = sshll.u32 [#allocation2], 4
      %s19 = int_to_ptr.vmem [resolvable:$true] %s18
      %21 = dma.hbm_to_vmem [thread:$0]  %s0, 32, %s19, [#allocation3]
    $region5: #{_linear_add_relu.1} parent=1 // pred_fallthru
      _
    // Predicated region
    $region6: #{_linear_add_relu.1} parent=1 // pred_check
      _
    $region7: #{_linear_add_relu.1} parent=1 // pred_check_branch
      %23 = sbr.rel (0) target = $region9
    $region8: #{_linear_add_relu.1} parent=1 // pred_region
      %s25 = ssub.s32 512, 512
      %26 = vsyncadd [#allocation6], %s25
      %s27 = sshll.u32 [#allocation5], 4
      %s28 = int_to_ptr.vmem [resolvable:$true] %s27
      %33 = dma.hbm_to_vmem [thread:$0]  %s1, 512, %s28, [#allocation6], 256, 256, 16
    $region9: #{_linear_add_relu.1} parent=1 // pred_fallthru
      _
    // Predicated region
    $region10: #{_linear_add_relu.1} parent=1 // pred_check
      _
    $region11: #{_linear_add_relu.1} parent=1 // pred_check_branch
      %35 = sbr.rel (0) target = $region13
    $region12: #{_linear_add_relu.1} parent=1 // pred_region
      _
    $region13: #{_linear_add_relu.1} parent=1 // pred_fallthru
      _
    // Predicated region
    $region14: #{_linear_add_relu.1} parent=1 // pred_check
      _
    $region15: #{_linear_add_relu.1} parent=1 // pred_check_branch
      %37 = sbr.rel (0) target = $region17
    $region16: #{_linear_add_relu.1} parent=1 // pred_region
      _
    $region17: #{_linear_add_relu.1} parent=1 // pred_fallthru
      _
    // Predicated region
    $region18: #{_linear_add_relu.1} parent=1 // pred_check
      _
    $region19: #{_linear_add_relu.1} parent=1 // pred_check_branch
      %39 = sbr.rel (0) target = $region21
    $region20: #{_linear_add_relu.1} parent=1 // pred_region
      %40 = dma.done [#allocation3], 32
    $region21: #{_linear_add_relu.1} parent=1 // pred_fallthru
      _
    // Predicated region
    $region22: #{_linear_add_relu.1} parent=1 // pred_check
      _
    $region23: #{_linear_add_relu.1} parent=1 // pred_check_branch
      %42 = sbr.rel (0) target = $region25
    $region24: #{_linear_add_relu.1} parent=1 // pred_region
      %43 = dma.done [#allocation6], 512
    $region25: #{_linear_add_relu.1} parent=1 // pred_fallthru
      _
    %v44 = vld [vmem:[#allocation2] sm:$0x3]
    %v45 = vld [vmem:[#allocation5] sm:$0xff]
    %v46 = vld [vmem:[#allocation5 + $0x8] sm:$0xff]
    %v47 = vld [vmem:[#allocation5 + $0x10] sm:$0x3]
    %v48 = vld [vmem:[#allocation5 + $0x18] sm:$0x3]
    %v49 = vld [vmem:[%s2] sm:$0x1]
    %v51 = vlaneseq
    %v52 = vshrl.u32 %v51, 7
    %v53 = vsub.s32 0, %v52
    %v54 = vrot.slane %v44, %v53
    %v55 = vlaneseq
    %v56 = vshrl.u32 %v55, 7
    %v57 = vsub.s32 1, %v56
    %v58 = vrot.slane %v44, %v57
    %61 = vmatprep.subr.mxu0 %v46
    %62 = vmatpush1.xpose.msra.mxu0 %v45
    %63 = vmatprep.subr.mxu0 %v48
    %64 = vmatpush1.xpose.msra.mxu0 %v47
    %65 = vmatprep.subr.mxu0 0.0
    %66 = vmatpush1.xpose.msra.mxu0 0.0
    %67 = vmatprep.subr.mxu0 0.0
    %68 = vmatpush1.xpose.msra.mxu0 0.0
    %69 = vmatprep.subr.mxu0 0.0
    %70 = vmatpush1.xpose.msra.mxu0 0.0
    %71 = vmatprep.subr.mxu0 0.0
    %72 = vmatpush1.xpose.msra.mxu0 0.0
    %73 = vmatprep.subr.mxu0 0.0
    %74 = vmatpush1.xpose.msra.mxu0 0.0
    %75 = vmatprep.subr.mxu0 0.0
    %76 = vmatpush1.xpose.msra.mxu0 0.0
    %77 = vmatprep.subr.mxu0 0.0
    %78 = vmatpush1.xpose.msra.mxu0 0.0
    %79 = vmatprep.subr.mxu0 0.0
    %80 = vmatpush1.xpose.msra.mxu0 0.0
    %81 = vmatprep.subr.mxu0 0.0
    %82 = vmatpush1.xpose.msra.mxu0 0.0
    %83 = vmatprep.subr.mxu0 0.0
    %84 = vmatpush1.xpose.msra.mxu0 0.0
    %85 = vmatprep.subr.mxu0 0.0
    %86 = vmatpush1.xpose.msra.mxu0 0.0
    %87 = vmatprep.subr.mxu0 0.0
    %88 = vmatpush1.xpose.msra.mxu0 0.0
    %89 = vmatprep.subr.mxu0 0.0
    %90 = vmatpush1.xpose.msra.mxu0 0.0
    %91 = vmatprep.subr.mxu0 0.0
    %92 = vmatpush1.xpose.msra.mxu0 0.0
    %93 = vmatprep.subr.mxu0 0.0
    %94 = vmatpush1.xpose.msra.mxu0 0.0
    %95 = vmatprep.subr.mxu0 0.0
    %96 = vmatpush1.xpose.msra.mxu0 0.0
    %97 = vmatprep.subr.mxu0 0.0
    %98 = vmatpush1.xpose.msra.mxu0 0.0
    %99 = vmatprep.subr.mxu0 0.0
    %100 = vmatpush1.xpose.msra.mxu0 0.0
    %101 = vmatprep.subr.mxu0 0.0
    %102 = vmatpush1.xpose.msra.mxu0 0.0
    %103 = vmatprep.subr.mxu0 0.0
    %104 = vmatpush1.xpose.msra.mxu0 0.0
    %105 = vmatprep.subr.mxu0 0.0
    %106 = vmatpush1.xpose.msra.mxu0 0.0
    %107 = vmatprep.subr.mxu0 0.0
    %108 = vmatpush1.xpose.msra.mxu0 0.0
    %109 = vmatprep.subr.mxu0 0.0
    %110 = vmatpush1.xpose.msra.mxu0 0.0
    %111 = vmatprep.subr.mxu0 0.0
    %112 = vmatpush1.xpose.msra.mxu0 0.0
    %113 = vmatprep.subr.mxu0 0.0
    %114 = vmatpush1.xpose.msra.mxu0 0.0
    %115 = vmatprep.subr.mxu0 0.0
    %116 = vmatpush1.xpose.msra.mxu0 0.0
    %117 = vmatprep.subr.mxu0 0.0
    %118 = vmatpush1.xpose.msra.mxu0 0.0
    %119 = vmatprep.subr.mxu0 0.0
    %120 = vmatpush1.xpose.msra.mxu0 0.0
    %121 = vmatprep.subr.mxu0 0.0
    %122 = vmatpush1.xpose.msra.mxu0 0.0
    %123 = vmatprep.subr.mxu0 0.0
    %124 = vmatpush1.xpose.msra.mxu0 0.0
    %125 = vmatprep.mubr.f32.mxu0 %v58
    %126 = vmatmul.mubr.f32.gmra.mrb[0].mxu0 %v54
    %v127 = vpop.f32.mrb[0].mxu0
    %v128 = vadd.f32 %v49, %v127
    %v129 = vpop.f32.mrb[0].mxu0
    %130 = vdwg.mxu0
    %v131 = vld [vmem:[%s3] sm:$0x1]
    %v132 = vadd.f32 %v128, %v131
    %v133 = vmax.f32 %v132, 0.0
    %vm134 = vcmask 73728
    %135 = vst.msk [vmem:[#allocation7] sm:$0x1] %vm134, %v133
    // Predicated region
    $region26: #{_linear_add_relu.1} parent=1 // pred_check
      _
    $region27: #{_linear_add_relu.1} parent=1 // pred_check_branch
      %137 = sbr.rel (0) target = $region29
    $region28: #{_linear_add_relu.1} parent=1 // pred_region
      %s139 = ssub.s32 16, 16
      %140 = vsyncadd [#allocation4], %s139
      %s142 = sshll.u32 [#allocation7], 4
      %s143 = int_to_ptr.vmem [resolvable:$true] %s142
      %145 = dma.vmem_to_hbm [thread:$0]  %s143, 16, %s4, [#allocation4]
    $region29: #{_linear_add_relu.1} parent=1 // pred_fallthru
      _
    // Predicated region
    $region30: #{_linear_add_relu.1} parent=1 // pred_check
      _
    $region31: #{_linear_add_relu.1} parent=1 // pred_check_branch
      %147 = sbr.rel (0) target = $region33
    $region32: #{_linear_add_relu.1} parent=1 // pred_region
      %148 = dma.done [#allocation4], 16
    $region33: #{_linear_add_relu.1} parent=1 // pred_fallthru
      _
    %149 = vsyncpa [#allocation3], 1
    %150 = vsyncpa [#allocation6], 1
    %151 = vsyncpa [#allocation4], 1

</llo_original>
